<compile_context>
chip_gen: v6e
topology: v6e:2x2x1
jax: 0.10.0
libtpu: 0.0.40
codegen_flags: <defaults>
</compile_context>

<pallas_src>
import math
import functools

import numpy as np
import jax
import jax.numpy as jnp
from jax.experimental import pallas as pl
from jax.experimental.pallas import tpu as pltpu

# Older JAX releases spell this pltpu.TPUCompilerParams.
_CompilerParams = getattr(pltpu, "CompilerParams", None) or getattr(
    pltpu, "TPUCompilerParams"
)

_VMEM_LIMIT = 32 * 1024 * 1024          # scoped-VMEM request (fits v5e/v6e/v7x)
_PIPELINE_BUDGET = 24 * 1024 * 1024     # double-buffered totals of big streams


# ----------------------------- kernels ------------------------------------ #

def _pe_eval_kernel(x_ref, w_ref, phase_ref, o_ref):
    # (TS, B*D) tile of x; PE recomputed in-kernel: pe = sin(s * w + phase).
    ts = x_ref.shape[0]
    row = jax.lax.broadcasted_iota(jnp.int32, x_ref.shape, 0) + pl.program_id(0) * ts
    pe = jnp.sin(row.astype(jnp.float32) * w_ref[...] + phase_ref[...])
    o_ref[...] = (x_ref[...] + pe).astype(o_ref.dtype)


def _pe_train_kernel(seed_ref, x_ref, w_ref, phase_ref, o_ref, *, threshold, scale):
    # Same PE math + inverted dropout with on-core PRNG (no HBM bits stream).
    i = pl.program_id(0)
    ts = x_ref.shape[0]
    row = jax.lax.broadcasted_iota(jnp.int32, x_ref.shape, 0) + i * ts
    pe = jnp.sin(row.astype(jnp.float32) * w_ref[...] + phase_ref[...])
    y = x_ref[...] + pe

    pltpu.prng_seed(seed_ref[0] + i)                     # independent per tile
    bits = pltpu.prng_random_bits(x_ref.shape)
    if bits.dtype != jnp.int32:
        bits = pltpu.bitcast(bits, jnp.int32)
    bits = bits & jnp.int32(0x7FFFFFFF)                  # uniform in [0, 2^31)
    keep = bits >= jnp.int32(threshold)                  # P(keep) = 1 - p
    o_ref[...] = (
        y * jnp.where(keep, jnp.float32(scale), jnp.float32(0.0))
    ).astype(o_ref.dtype)


# Conservative fallback kernels: x kept (S, B, D), small (TS, D) PE tile
# broadcast over the batch (sublane) axis in-kernel; host-generated bits.
def _pe_eval_fb_kernel(x_ref, pe_ref, o_ref):
    o_ref[...] = (x_ref[...] + pe_ref[...][:, None, :]).astype(o_ref.dtype)


def _pe_train_fb_kernel(x_ref, pe_ref, bits_ref, o_ref, *, threshold, scale):
    y = x_ref[...] + pe_ref[...][:, None, :]
    keep = bits_ref[...] >= jnp.int32(threshold)
    o_ref[...] = (
        y * jnp.where(keep, jnp.float32(scale), jnp.float32(0.0))
    ).astype(o_ref.dtype)


# ----------------------------- helpers ------------------------------------ #

def make_positional_encoding(max_len: int, d_model: int) -> jnp.ndarray:
    """Sinusoidal table, identical math to the PyTorch __init__. Shape (L, D)."""
    position = jnp.arange(max_len, dtype=jnp.float32)[:, None]
    div_term = jnp.exp(
        jnp.arange(0, d_model, 2, dtype=jnp.float32)
        * (-math.log(10000.0) / d_model)
    )
    ang = position * div_term
    pe = jnp.zeros((max_len, d_model), jnp.float32)
    pe = pe.at[:, 0::2].set(jnp.sin(ang))
    pe = pe.at[:, 1::2].set(jnp.cos(ang))
    return pe


def _per_column_tables(d_model: int, batch: int):
    """Tiny (1, B*D) frequency / phase tables so pe[s, col] = sin(s*w + phase)."""
    d = np.arange(d_model)
    w = np.exp((d - (d % 2)) * (-math.log(10000.0) / d_model))   # div_term per feat
    phase = np.where(d % 2 == 1, math.pi / 2.0, 0.0)             # cos = sin(.+pi/2)
    w_col = jnp.asarray(np.tile(w, batch)[None, :], dtype=jnp.float32)
    phase_col = jnp.asarray(np.tile(phase, batch)[None, :], dtype=jnp.float32)
    return w_col, phase_col


def _choose_seq_tile(n_rows: int, row_bytes: int, n_streams: int, requested=None):
    """Sequence rows per grid step, sized by bytes (not a row cap):
       - per-operand tile target <= 8 MiB,
       - double-buffered totals of the big streams <= ~24 MiB (fits v7x/v6e/v5e),
       - keep >= 2 grid steps when S is large so v7x's 2 TensorCores both work,
       - multiple of 8 (sublane) or the full extent."""
    if requested is not None:
        ts = max(8, (int(requested) // 8) * 8)
        return n_rows if ts >= n_rows else ts
    per_tile = max(row_bytes, min(8 * 1024 * 1024,
                                  _PIPELINE_BUDGET // (2 * n_streams)))
    ts = max(8, (per_tile // max(1, row_bytes) // 8) * 8)
    if n_rows >= 16:
        half = -(-n_rows // 2)              # ceil(n_rows / 2)
        half = -(-half // 8) * 8            # round up to multiple of 8
        ts = min(ts, half)
    return n_rows if ts >= n_rows else ts


# ----------------------------- wrappers ------------------------------------ #

def _pe_lane_dense(x, p, training, seed, seq_tile):
    """Primary path: lane-dense (S, B*D) slab, in-kernel PE, in-kernel PRNG."""
    S, B, D = x.shape
    C = B * D
    x2 = x.reshape(S, C)                               # free, row-major view
    w_col, phase_col = _per_column_tables(D, B)

    train = training and p > 0.0
    TS = _choose_seq_tile(S, C * 4, 3 if train else 2, seq_tile)
    grid = (pl.cdiv(S, TS),)
    cparams = _CompilerParams(dimension_semantics=("parallel",),
                              vmem_limit_bytes=_VMEM_LIMIT)
    out_shape = jax.ShapeDtypeStruct((S, C), x.dtype)

    if not train:
        grid_spec = pltpu.PrefetchScalarGridSpec(
            num_scalar_prefetch=0, grid=grid,
            in_specs=[pl.BlockSpec((TS, C), lambda i: (i, 0)),
                      pl.BlockSpec((1, C), lambda i: (0, 0)),
                      pl.BlockSpec((1, C), lambda i: (0, 0))],
            out_specs=pl.BlockSpec((TS, C), lambda i: (i, 0)))
        out2 = pl.pallas_call(
            _pe_eval_kernel, out_shape=out_shape,
            grid_spec=grid_spec, compiler_params=cparams,
        )(x2, w_col, phase_col)
        return out2.reshape(S, B, D)

    threshold = min(int(round(float(p) * float(2 ** 31))), 2 ** 31 - 1)
    scale = 1.0 / (1.0 - float(p))
    kernel = functools.partial(_pe_train_kernel, threshold=threshold, scale=scale)
    seed_arr = jnp.asarray([seed], dtype=jnp.int32)
    grid_spec = pltpu.PrefetchScalarGridSpec(
        num_scalar_prefetch=1, grid=grid,
        in_specs=[pl.BlockSpec((TS, C), lambda i, s_ref: (i, 0)),
                  pl.BlockSpec((1, C), lambda i, s_ref: (0, 0)),
                  pl.BlockSpec((1, C), lambda i, s_ref: (0, 0))],
        out_specs=pl.BlockSpec((TS, C), lambda i, s_ref: (i, 0)))
    out2 = pl.pallas_call(
        kernel, out_shape=out_shape,
        grid_spec=grid_spec, compiler_params=cparams,
    )(seed_arr, x2, w_col, phase_col)
    return out2.reshape(S, B, D)


def _pe_fallback(x, p, training, seed, seq_tile, max_len):
    """Conservative path: (S, B, D) blocks + small (TS, D) PE tile broadcast
    over the batch (sublane) axis in-kernel; host-generated dropout bits."""
    S, B, D = x.shape
    pe_small = make_positional_encoding(max_len, D)[:S]          # (S, D) tiny
    train = training and p > 0.0
    TS = _choose_seq_tile(S, B * D * 4, 3 if train else 2, seq_tile)
    grid = (pl.cdiv(S, TS),)
    cparams = _CompilerParams(dimension_semantics=("parallel",),
                              vmem_limit_bytes=_VMEM_LIMIT)
    out_shape = jax.ShapeDtypeStruct((S, B, D), x.dtype)
    x_spec = pl.BlockSpec((TS, B, D), lambda i: (i, 0, 0))
    pe_spec = pl.BlockSpec((TS, D), lambda i: (i, 0))

    if not train:
        return pl.pallas_call(
            _pe_eval_fb_kernel, out_shape=out_shape, grid=grid,
            in_specs=[x_spec, pe_spec], out_specs=x_spec,
            compiler_params=cparams,
        )(x, pe_small)

    threshold = min(int(round(float(p) * float(2 ** 31))), 2 ** 31 - 1)
    scale = 1.0 / (1.0 - float(p))
    bits = (jax.random.bits(jax.random.PRNGKey(seed), (S, B, D),
                            dtype=jnp.uint32) >> 1).astype(jnp.int32)
    kernel = functools.partial(_pe_train_fb_kernel, threshold=threshold, scale=scale)
    return pl.pallas_call(
        kernel, out_shape=out_shape, grid=grid,
        in_specs=[x_spec, pe_spec, x_spec], out_specs=x_spec,
        compiler_params=cparams,
    )(x, pe_small, bits)


def decoder_positional_encoding(x, *, p: float = 0.1, training: bool = False,
                                seed: int = 0, seq_tile=None, max_len: int = 30):
    """x: (S, B, D). Returns dropout(x + pe[:S]) — dropout only when training."""
    S, B, D = x.shape
    assert S <= max_len, "sequence length exceeds max_len (PE buffer size)"
    try:
        return _pe_lane_dense(x, p, training, seed, seq_tile)
    except Exception:
        # TODO(synk): fallback only for toolchains whose Mosaic build lacks
        # in-kernel sin / PRNG lowering; numerics/semantics are identical.
        return _pe_fallback(x, p, training, seed, seq_tile, max_len)


# --------------------------------- main ------------------------------------ #

if __name__ == "__main__":
    MAX_LEN, D_MODEL = 30, 32
    SEQ, BATCH, P_DROP = 8, 2, 0.1

    key = jax.random.PRNGKey(0)
    kx, kx2 = jax.random.split(key)
    x = jax.random.normal(kx, (SEQ, BATCH, D_MODEL), dtype=jnp.float32)

    pe_table = make_positional_encoding(MAX_LEN, D_MODEL)
    ref = x + pe_table[:SEQ][:, None, :]

    # Eval mode (dropout = identity, matches nn.Dropout.eval()).
    out_eval = jax.block_until_ready(
        decoder_positional_encoding(x, p=P_DROP, training=False, max_len=MAX_LEN))
    assert out_eval.shape == (SEQ, BATCH, D_MODEL)
    assert out_eval.dtype == jnp.float32
    assert jnp.allclose(out_eval, ref, atol=1e-4, rtol=1e-4)

    # Longer sequence with a forced small tile: multi-step pipelined grid plus
    # a ragged last tile, PE recomputed correctly across tiles.
    x_long = jax.random.normal(kx2, (MAX_LEN, BATCH, D_MODEL), dtype=jnp.float32)
    ref_long = x_long + pe_table[:MAX_LEN][:, None, :]
    out_long = jax.block_until_ready(
        decoder_positional_encoding(x_long, p=P_DROP, training=False,
                                    seq_tile=8, max_len=MAX_LEN))
    assert jnp.allclose(out_long, ref_long, atol=1e-4, rtol=1e-4)

    # Training mode: every element is either dropped (0) or kept * 1/(1-p).
    out_train = jax.block_until_ready(
        decoder_positional_encoding(x, p=P_DROP, training=True, seed=1234,
                                    max_len=MAX_LEN))
    assert out_train.shape == (SEQ, BATCH, D_MODEL)
    scaled = ref / (1.0 - P_DROP)
    is_dropped = jnp.abs(out_train) < 1e-6
    is_kept = jnp.abs(out_train - scaled) < 5e-4
    assert bool(jnp.all(is_dropped | is_kept))
    drop_frac = float(jnp.mean(is_dropped.astype(jnp.float32)))
    assert 0.0 < drop_frac < 0.4   # ~p = 0.1 with overwhelming probability

    print("KERNEL_OK")
</pallas_src>

<mosaic_0001>
module attributes {stable_mosaic.version = 11 : i64} {
  func.func @_pe_eval_kernel(%arg0: i32, %arg1: memref<8x64xf32, #tpu.memory_space<vmem>>, %arg2: memref<1x64xf32, #tpu.memory_space<vmem>>, %arg3: memref<1x64xf32, #tpu.memory_space<vmem>>, %arg4: memref<8x64xf32, #tpu.memory_space<vmem>>) attributes {dimension_semantics = [#tpu.dimension_semantics<parallel>], iteration_bounds = array<i64: 1>, scalar_prefetch = 0 : i64, scratch_operands = 0 : i64, tpu.core_type = #tpu.core_type<tc>, window_params = [{transform_indices = @transform_0, window_bounds = array<i64: 8, 64>}, {pipeline_mode = #tpu.pipeline_mode<synchronous>, transform_indices = @transform_1, window_bounds = array<i64: 1, 64>}, {pipeline_mode = #tpu.pipeline_mode<synchronous>, transform_indices = @transform_2, window_bounds = array<i64: 1, 64>}, {transform_indices = @transform_3, window_bounds = array<i64: 8, 64>}]} {
    %0 = tpu.iota {dimensions = array<i32: 0>} : vector<8x64xi32>
    %c8_i32 = arith.constant 8 : i32
    %1 = arith.muli %arg0, %c8_i32 : i32
    %2 = vector.broadcast %1 : i32 to vector<8x64xi32>
    %3 = arith.addi %0, %2 : vector<8x64xi32>
    %4 = arith.sitofp %3 : vector<8x64xi32> to vector<8x64xf32>
    %c0 = arith.constant 0 : index
    %c0_0 = arith.constant 0 : index
    %5 = vector.load %arg2[%c0, %c0_0] : memref<1x64xf32, #tpu.memory_space<vmem>>, vector<1x64xf32>
    %6 = vector.broadcast %5 : vector<1x64xf32> to vector<8x64xf32>
    %7 = arith.mulf %4, %6 : vector<8x64xf32>
    %c0_1 = arith.constant 0 : index
    %c0_2 = arith.constant 0 : index
    %8 = vector.load %arg3[%c0_1, %c0_2] : memref<1x64xf32, #tpu.memory_space<vmem>>, vector<1x64xf32>
    %9 = vector.broadcast %8 : vector<1x64xf32> to vector<8x64xf32>
    %10 = arith.addf %7, %9 : vector<8x64xf32>
    %11 = math.sin %10 : vector<8x64xf32>
    %c0_3 = arith.constant 0 : index
    %c0_4 = arith.constant 0 : index
    %12 = vector.load %arg1[%c0_3, %c0_4] : memref<8x64xf32, #tpu.memory_space<vmem>>, vector<8x64xf32>
    %13 = arith.addf %12, %11 : vector<8x64xf32>
    %c0_5 = arith.constant 0 : index
    %c0_6 = arith.constant 0 : index
    %14 = vector.load %arg4[%c0_5, %c0_6] : memref<8x64xf32, #tpu.memory_space<vmem>>, vector<8x64xf32>
    tpu.vector_store %arg4[%c0_5, %c0_6], %13 {strides = array<i32>} : memref<8x64xf32, #tpu.memory_space<vmem>>, vector<8x64xf32>,
    return
  }
  func.func @transform_0(%arg0: i32) -> (i32, i32) {
    %c0_i32 = arith.constant 0 : i32
    %c0_i32_0 = arith.constant 0 : i32
    return %arg0, %c0_i32 : i32, i32
  }
  func.func @transform_1(%arg0: i32) -> (i32, i32) {
    %c0_i32 = arith.constant 0 : i32
    %c0_i32_0 = arith.constant 0 : i32
    %c0_i32_1 = arith.constant 0 : i32
    return %c0_i32, %c0_i32_0 : i32, i32
  }
  func.func @transform_2(%arg0: i32) -> (i32, i32) {
    %c0_i32 = arith.constant 0 : i32
    %c0_i32_0 = arith.constant 0 : i32
    %c0_i32_1 = arith.constant 0 : i32
    return %c0_i32, %c0_i32_0 : i32, i32
  }
  func.func @transform_3(%arg0: i32) -> (i32, i32) {
    %c0_i32 = arith.constant 0 : i32
    %c0_i32_0 = arith.constant 0 : i32
    return %arg0, %c0_i32 : i32, i32
  }
}

module attributes {stable_mosaic.version = 11 : i64} {
  func.func @_pe_eval_fb_kernel(%arg0: i32, %arg1: memref<8x2x32xf32, #tpu.memory_space<vmem>>, %arg2: memref<8x32xf32, #tpu.memory_space<vmem>>, %arg3: memref<8x2x32xf32, #tpu.memory_space<vmem>>) attributes {dimension_semantics = [#tpu.dimension_semantics<parallel>], iteration_bounds = array<i64: 1>, scalar_prefetch = 0 : i64, scratch_operands = 0 : i64, tpu.core_type = #tpu.core_type<tc>, window_params = [{transform_indices = @transform_0, window_bounds = array<i64: 8, 2, 32>}, {transform_indices = @transform_1, window_bounds = array<i64: 8, 32>}, {transform_indices = @transform_2, window_bounds = array<i64: 8, 2, 32>}]} {
    %c0 = arith.constant 0 : index
    %c0_0 = arith.constant 0 : index
    %c0_1 = arith.constant 0 : index
    %0 = vector.load %arg1[%c0, %c0_0, %c0_1] : memref<8x2x32xf32, #tpu.memory_space<vmem>>, vector<8x2x32xf32>
    %c0_2 = arith.constant 0 : index
    %c0_3 = arith.constant 0 : index
    %1 = vector.load %arg2[%c0_2, %c0_3] : memref<8x32xf32, #tpu.memory_space<vmem>>, vector<8x32xf32>
    %2 = vector.shape_cast %1 : vector<8x32xf32> to vector<8x1x32xf32>
    %3 = vector.broadcast %2 : vector<8x1x32xf32> to vector<8x2x32xf32>
    %4 = arith.addf %0, %3 : vector<8x2x32xf32>
    %c0_4 = arith.constant 0 : index
    %c0_5 = arith.constant 0 : index
    %c0_6 = arith.constant 0 : index
    %5 = vector.load %arg3[%c0_4, %c0_5, %c0_6] : memref<8x2x32xf32, #tpu.memory_space<vmem>>, vector<8x2x32xf32>
    tpu.vector_store %arg3[%c0_4, %c0_5, %c0_6], %4 {strides = array<i32>} : memref<8x2x32xf32, #tpu.memory_space<vmem>>, vector<8x2x32xf32>,
    return
  }
  func.func @transform_0(%arg0: i32) -> (i32, i32, i32) {
    %c0_i32 = arith.constant 0 : i32
    %c0_i32_0 = arith.constant 0 : i32
    %c0_i32_1 = arith.constant 0 : i32
    return %arg0, %c0_i32, %c0_i32_0 : i32, i32, i32
  }
  func.func @transform_1(%arg0: i32) -> (i32, i32) {
    %c0_i32 = arith.constant 0 : i32
    %c0_i32_0 = arith.constant 0 : i32
    return %arg0, %c0_i32 : i32, i32
  }
  func.func @transform_2(%arg0: i32) -> (i32, i32, i32) {
    %c0_i32 = arith.constant 0 : i32
    %c0_i32_0 = arith.constant 0 : i32
    %c0_i32_1 = arith.constant 0 : i32
    return %arg0, %c0_i32, %c0_i32_0 : i32, i32, i32
  }
}

</mosaic_0001>

<llo_original>
// kernel: tpu_custom_call.1
$region0: #{tpu_custom_call.1}
  #allocation0 [shape = 'u32[]', space=smem, size = 0x4, offset = 0x4, fixed_abs, tag = 'smem constant byte address 0x4 - core index']
  #allocation1 [shape = 'u32[144,128]{1,0:T(1,128)}', space=vmem, size = 0x12000, scoped, tag = 'internal scratch']
  %s0 = inlined_call_operand.hbm [shape: f32[8,64], index: 0, kind: input, shape index: {}]
  %s1 = inlined_call_operand.vmem [shape: f32[1,64], index: 1, kind: input, shape index: {}]
  %s2 = inlined_call_operand.vmem [shape: f32[1,64], index: 2, kind: input, shape index: {}]
  %s3 = inlined_call_operand.hbm [shape: f32[8,64], index: 3, kind: output, shape index: {}]
  %s4 = sld [smem:[#allocation0]]
  $region26: #{tpu_custom_call.1} parent=0
    _
  %s6 = ssub.s32 1, %s4
  %s7 = scalar_select 0, %s6, %s4
  $region1: #{tpu_custom_call.1} parent=0
    #allocation2 [shape = 'u8[4096]{0}', space=vmem, size = 0x1000, scoped, tag = 'input window, operand 0, single buffered']
    #allocation3 [shape = 's32[1]{0}', space=sflag, size = 0x4, scoped, tag = 'scoped memory for tpu_custom_call.1']
    #allocation4 [shape = 's32[1]{0}', space=sflag, size = 0x4, scoped, tag = 'scoped memory for tpu_custom_call.1']
    #allocation5 [shape = 'u8[4096]{0}', space=vmem, size = 0x1000, scoped, tag = 'output window, operand 0, single buffered']
    %8 = vsyncpa [#allocation3], 0
    %9 = vsyncpa [#allocation4], 0
    // Predicated region
    $region2: #{tpu_custom_call.1} parent=1 // pred_check
      _
    $region3: #{tpu_custom_call.1} parent=1 // pred_check_branch
      %11 = sbr.rel (0) target = $region5
    $region4: #{tpu_custom_call.1} parent=1 // pred_region
      %s13 = ssub.s32 128, 128
      %14 = vsyncadd [#allocation3], %s13
      %s16 = sshll.u32 [#allocation2], 4
      %s17 = int_to_ptr.vmem [resolvable:$true] %s16
      %19 = dma.hbm_to_vmem [thread:$0]  %s0, 128, %s17, [#allocation3]
    $region5: #{tpu_custom_call.1} parent=1 // pred_fallthru
      _
    // Predicated region
    $region6: #{tpu_custom_call.1} parent=1 // pred_check
      _
    $region7: #{tpu_custom_call.1} parent=1 // pred_check_branch
      %21 = sbr.rel (0) target = $region9
    $region8: #{tpu_custom_call.1} parent=1 // pred_region
      _
    $region9: #{tpu_custom_call.1} parent=1 // pred_fallthru
      _
    // Predicated region
    $region10: #{tpu_custom_call.1} parent=1 // pred_check
      _
    $region11: #{tpu_custom_call.1} parent=1 // pred_check_branch
      %23 = sbr.rel (0) target = $region13
    $region12: #{tpu_custom_call.1} parent=1 // pred_region
      _
    $region13: #{tpu_custom_call.1} parent=1 // pred_fallthru
      _
    // Predicated region
    $region14: #{tpu_custom_call.1} parent=1 // pred_check
      _
    $region15: #{tpu_custom_call.1} parent=1 // pred_check_branch
      %25 = sbr.rel (0) target = $region17
    $region16: #{tpu_custom_call.1} parent=1 // pred_region
      %26 = dma.done [#allocation3], 128
    $region17: #{tpu_custom_call.1} parent=1 // pred_fallthru
      _
    %v27 = vlaneseq
    %v28 = vshrl.u32 %v27, 7
    %s29 = smul.u32 0, 8
    %v30 = vstv %s29
    %v31 = vadd.s32 %v28, %v30
    %v32 = vcvt.s32.f32 %v31
    %v33 = vld [vmem:[%s1] sm:$0x1]
    %v35 = vlaneseq
    %v36 = vshrl.u32 %v35, 7
    %v37 = vsub.s32 0, %v36
    %v38 = vrot.slane %v33, %v37
    %v40 = vmul.f32 %v32, %v38
    %v41 = vld [vmem:[%s2] sm:$0x1]
    %v43 = vlaneseq
    %v44 = vshrl.u32 %v43, 7
    %v45 = vsub.s32 0, %v44
    %v46 = vrot.slane %v41, %v45
    %v48 = vadd.f32 %v40, %v46
    %v49 = vand.u32 2147483647, %v48
    %vm50 = vcmp.le.f32.partialorder %v49, 0.7853982
    %vm51 = vcmp.lt.s32.totalorder %v48, 0
    %v52 = vand.u32 %v48, 2139095040
    %v53 = vshrl.u32 %v52, 23
    %v54 = vsub.s32 %v53, 127
    %v55 = vand.u32 2147483647, %v48
    %v56 = vand.u32 %v55, 8388607
    %v57 = vor.u32 %v56, 8388608
    %v58 = vsub.s32 0, %v57
    %v59 = vadd.s32 %v54, 1
    %vm60 = vcmp.gt.s32.totalorder %v59, 0
    %v61 = vsel %vm60, %v59, 0
    %v62 = vshrl.u32 %v61, 5
    %v63 = vand.u32 %v61, 31
    %v64 = vsub.s32 32, %v63
    %v65 = vshrl.u32 683565275, %v64
    %v66 = vshll.u32 683565275, %v63
    %v67 = vshrl.u32 2475754826, %v64
    %v68 = vor.u32 %v66, %v67
    %v69 = vshll.u32 2475754826, %v63
    %v70 = vshrl.u32 2131351028, %v64
    %v71 = vor.u32 %v69, %v70
    %v72 = vshll.u32 2131351028, %v63
    %v73 = vshrl.u32 2102212464, %v64
    %v74 = vor.u32 %v72, %v73
    %v75 = vshll.u32 2102212464, %v63
    %v76 = vshrl.u32 920167782, %v64
    %v77 = vor.u32 %v75, %v76
    %v78 = vshll.u32 920167782, %v63
    %v79 = vshrl.u32 1326507024, %v64
    %v80 = vor.u32 %v78, %v79
    %vm81 = vcmp.lt.s32.totalorder %v62, 1
    %vm82 = vcmp.lt.s32.totalorder %v62, 2
    %vm83 = vcmp.lt.s32.totalorder %v62, 3
    %vm84 = vcmp.lt.s32.totalorder %v62, 4
    %v85 = vsel %vm81, %v65, %v68
    %v86 = vsel %vm84, %v74, 2102212464
    %v87 = vsel %vm83, %v71, %v86
    %v88 = vsel %vm82, %v85, %v87
    %v89 = vsel %vm81, %v68, %v71
    %v90 = vsel %vm84, %v77, 920167782
    %v91 = vsel %vm83, %v74, %v90
    %v92 = vsel %vm82, %v89, %v91
    %v93 = vsel %vm81, %v71, %v74
    %v94 = vsel %vm84, %v80, 1326507024
    %v95 = vsel %vm83, %v77, %v94
    %v96 = vsel %vm82, %v93, %v95
    %v97 = vshll.u32 %v57, 8
    %v98 = vmul.u32.u64.compose %v97, %v96
    %v99 = vextract.low.u32 %v98
    %v100 = vextract.high.u32 %v98
    %v101 = vmul.u32.u64.compose %v97, %v92
    %v102 = vextract.low.u32 %v101
    %v103 = vextract.high.u32 %v101
    %v104 = vmul.u32 %v97, %v88
    %v105 = vadd.s32 %v100, %v102
    %vm106 = vc.u32 %v100, %v102
    %v107 = vadd.s32 %v103, 1
    %v108 = vsel %vm106, %v107, %v103
    %v109 = vadd.s32 %v104, %v108
    %v110 = vadd.s32 %v109, 536870912
    %v111 = vshrl.u32 %v110, 30
    %v112 = vshll.u32 %v111, 30
    %v113 = vsub.s32 %v109, %v112
    %vm114 = vcmp.lt.s32.totalorder %v113, 0
    %v115 = vsub.s32 0, %v113
    %v116 = vsel %vm114, %v115, %v113
    %v117 = vclz %v116
    %v118 = vsub.s32 %v117, 2
    %vm119 = vcmp.gt.s32.totalorder 0, %v118
    %v120 = vsel %vm119, 0, %v118
    %v121 = vsub.s32 32, %v120
    %v122 = vshll.u32 %v113, %v120
    %v123 = vshrl.u32 %v105, %v121
    %v124 = vor.u32 %v122, %v123
    %v125 = vsub.s32 4294967266, %v120
    %v126 = vadd.s32 %v125, 127
    %v127 = vshll.u32 %v126, 23
    %v128 = vor.u32 4788187, %v127
    %v129 = vand.u32 2147483647, %v128
    %v131 = vcvt.s32.f32 %v124
    %v132 = vmul.f32 %v131, %v129
    %v133 = vxor.u32 %v132, 2147483648
    %v134 = vsel %vm51, %v133, %v132
    %v135 = vsub.s32 4, %v111
    %v136 = vsel %vm51, %v135, %v111
    %v137 = vsel %vm50, %v48, %v134
    %v138 = vsel %vm50, 0, %v136
    %v139 = vcosq.f32.pop %v137
    %v140 = vsinq.f32.pop %v137
    %vm141 = vweird.f32 %v48
    %v142 = vadd.s32 %v138, 3
    %v143 = vand.u32 %v142, 3
    %vm144 = vcmp.lt.s32.totalorder %v143, 2
    %vm145 = vcmp.eq.s32.totalorder %v143, 0
    %v146 = vxor.u32 %v140, 2147483648
    %v147 = vsel %vm145, %v139, %v146
    %vm148 = vcmp.eq.s32.totalorder %v143, 2
    %v149 = vxor.u32 %v139, 2147483648
    %v150 = vsel %vm148, %v149, %v140
    %v151 = vsel %vm144, %v147, %v150
    %v152 = vsel %vm141, nan, %v151
    %v153 = vld [vmem:[#allocation2] sm:$0xff]
    %v154 = vadd.f32 %v153, %v152
    %vm155 = vcmask 523264
    %156 = vst.msk [vmem:[#allocation5] sm:$0xff] %vm155, %v154
    // Predicated region
    $region18: #{tpu_custom_call.1} parent=1 // pred_check
      _
    $region19: #{tpu_custom_call.1} parent=1 // pred_check_branch
      %158 = sbr.rel (0) target = $region21
    $region20: #{tpu_custom_call.1} parent=1 // pred_region
      %s160 = ssub.s32 128, 128
      %161 = vsyncadd [#allocation4], %s160
      %s163 = sshll.u32 [#allocation5], 4
      %s164 = int_to_ptr.vmem [resolvable:$true] %s163
      %166 = dma.vmem_to_hbm [thread:$0]  %s164, 128, %s3, [#allocation4]
    $region21: #{tpu_custom_call.1} parent=1 // pred_fallthru
      _
    // Predicated region
    $region22: #{tpu_custom_call.1} parent=1 // pred_check
      _
    $region23: #{tpu_custom_call.1} parent=1 // pred_check_branch
      %168 = sbr.rel (0) target = $region25
    $region24: #{tpu_custom_call.1} parent=1 // pred_region
      %169 = dma.done [#allocation4], 128
    $region25: #{tpu_custom_call.1} parent=1 // pred_fallthru
      _
    %170 = vsyncpa [#allocation3], 1
    %171 = vsyncpa [#allocation4], 1

// kernel: tpu_custom_call.1
$region0: #{tpu_custom_call.1}
  #allocation0 [shape = 'u32[]', space=smem, size = 0x4, offset = 0x4, fixed_abs, tag = 'smem constant byte address 0x4 - core index']
  #allocation1 [shape = 'u32[144,128]{1,0:T(1,128)}', space=vmem, size = 0x12000, scoped, tag = 'internal scratch']
  %s0 = inlined_call_operand.hbm [shape: f32[8,2,32], index: 0, kind: input, shape index: {}]
  %s1 = inlined_call_operand.hbm [shape: f32[8,32], index: 1, kind: input, shape index: {}]
  %s2 = inlined_call_operand.hbm [shape: f32[8,2,32], index: 2, kind: output, shape index: {}]
  %s3 = sld [smem:[#allocation0]]
  $region26: #{tpu_custom_call.1} parent=0
    _
  %s5 = ssub.s32 1, %s3
  %s6 = scalar_select 0, %s5, %s3
  $region1: #{tpu_custom_call.1} parent=0
    #allocation2 [shape = 'u8[8192]{0}', space=vmem, size = 0x2000, scoped, tag = 'input window, operand 0, single buffered']
    #allocation3 [shape = 's32[1]{0}', space=sflag, size = 0x4, scoped, tag = 'scoped memory for tpu_custom_call.1']
    #allocation4 [shape = 's32[1]{0}', space=sflag, size = 0x4, scoped, tag = 'scoped memory for tpu_custom_call.1']
    #allocation5 [shape = 'u8[4096]{0}', space=vmem, size = 0x1000, scoped, tag = 'input window, operand 1, single buffered']
    #allocation6 [shape = 's32[1]{0}', space=sflag, size = 0x4, scoped, tag = 'scoped memory for tpu_custom_call.1']
    #allocation7 [shape = 'u8[8192]{0}', space=vmem, size = 0x2000, scoped, tag = 'output window, operand 0, single buffered']
    %7 = vsyncpa [#allocation3], 0
    %8 = vsyncpa [#allocation6], 0
    %9 = vsyncpa [#allocation4], 0
    // Predicated region
    $region2: #{tpu_custom_call.1} parent=1 // pred_check
      _
    $region3: #{tpu_custom_call.1} parent=1 // pred_check_branch
      %11 = sbr.rel (0) target = $region5
    $region4: #{tpu_custom_call.1} parent=1 // pred_region
      %s13 = ssub.s32 256, 256
      %14 = vsyncadd [#allocation3], %s13
      %s15 = sshll.u32 [#allocation2], 4
      %s16 = int_to_ptr.vmem [resolvable:$true] %s15
      %21 = dma.hbm_to_vmem [thread:$0]  %s0, 256, %s16, [#allocation3], 32, 32, 2
    $region5: #{tpu_custom_call.1} parent=1 // pred_fallthru
      _
    // Predicated region
    $region6: #{tpu_custom_call.1} parent=1 // pred_check
      _
    $region7: #{tpu_custom_call.1} parent=1 // pred_check_branch
      %23 = sbr.rel (0) target = $region9
    $region8: #{tpu_custom_call.1} parent=1 // pred_region
      %s25 = ssub.s32 128, 128
      %26 = vsyncadd [#allocation6], %s25
      %s28 = sshll.u32 [#allocation5], 4
      %s29 = int_to_ptr.vmem [resolvable:$true] %s28
      %31 = dma.hbm_to_vmem [thread:$0]  %s1, 128, %s29, [#allocation6]
    $region9: #{tpu_custom_call.1} parent=1 // pred_fallthru
      _
    // Predicated region
    $region10: #{tpu_custom_call.1} parent=1 // pred_check
      _
    $region11: #{tpu_custom_call.1} parent=1 // pred_check_branch
      %33 = sbr.rel (0) target = $region13
    $region12: #{tpu_custom_call.1} parent=1 // pred_region
      %34 = dma.done [#allocation3], 256
    $region13: #{tpu_custom_call.1} parent=1 // pred_fallthru
      _
    // Predicated region
    $region14: #{tpu_custom_call.1} parent=1 // pred_check
      _
    $region15: #{tpu_custom_call.1} parent=1 // pred_check_branch
      %36 = sbr.rel (0) target = $region17
    $region16: #{tpu_custom_call.1} parent=1 // pred_region
      %37 = dma.done [#allocation6], 128
    $region17: #{tpu_custom_call.1} parent=1 // pred_fallthru
      _
    %v38 = vld [vmem:[#allocation2] sm:$0x3]
    %v39 = vld [vmem:[#allocation2 + $0x2] sm:$0x3]
    %v40 = vld [vmem:[#allocation2 + $0x4] sm:$0x3]
    %v41 = vld [vmem:[#allocation2 + $0x6] sm:$0x3]
    %v42 = vld [vmem:[#allocation2 + $0x8] sm:$0x3]
    %v43 = vld [vmem:[#allocation2 + $0xa] sm:$0x3]
    %v44 = vld [vmem:[#allocation2 + $0xc] sm:$0x3]
    %v45 = vld [vmem:[#allocation2 + $0xe] sm:$0x3]
    %v46 = vld [vmem:[#allocation5] sm:$0xff]
    %v48 = vcombine.high %v46, %v46
    %v50 = vunpack.c.l.s4 1966171168
    %v51 = vunpack.c.0.s8 %v50
    %v52 = vlaneseq
    %v53 = vshrl.u32 %v52, 7
    %v54 = vsub.s32 %v51, %v53
    %v55 = vrot.slane %v46, %v54
    %v57 = vunpack.c.l.s4 1966171168
    %v58 = vunpack.c.0.s8 %v57
    %v59 = vlaneseq
    %v60 = vshrl.u32 %v59, 7
    %v61 = vsub.s32 %v58, %v60
    %v62 = vrot.slane %v48, %v61
    %v63 = vcombine.high %v55, %v55
    %v64 = vcombine.high %v62, %v62
    %v66 = vunpack.c.l.s4 1966171168
    %v67 = vunpack.c.0.s8 %v66
    %v68 = vlaneseq
    %v69 = vshrl.u32 %v68, 7
    %v70 = vsub.s32 %v67, %v69
    %v71 = vrot.slane %v55, %v70
    %v73 = vunpack.c.l.s4 1966171168
    %v74 = vunpack.c.0.s8 %v73
    %v75 = vlaneseq
    %v76 = vshrl.u32 %v75, 7
    %v77 = vsub.s32 %v74, %v76
    %v78 = vrot.slane %v62, %v77
    %v80 = vunpack.c.l.s4 1966171168
    %v81 = vunpack.c.0.s8 %v80
    %v82 = vlaneseq
    %v83 = vshrl.u32 %v82, 7
    %v84 = vsub.s32 %v81, %v83
    %v85 = vrot.slane %v63, %v84
    %v87 = vunpack.c.l.s4 1966171168
    %v88 = vunpack.c.0.s8 %v87
    %v89 = vlaneseq
    %v90 = vshrl.u32 %v89, 7
    %v91 = vsub.s32 %v88, %v90
    %v92 = vrot.slane %v64, %v91
    %v93 = vcombine.high %v71, %v71
    %v94 = vcombine.high %v78, %v78
    %v95 = vcombine.high %v85, %v85
    %v96 = vcombine.high %v92, %v92
    %v97 = vlaneseq
    %v98 = vshrl.u32 %v97, 7
    %v99 = vsub.s32 0, %v98
    %v100 = vrot.slane %v71, %v99
    %v101 = vlaneseq
    %v102 = vshrl.u32 %v101, 7
    %v103 = vsub.s32 0, %v102
    %v104 = vrot.slane %v85, %v103
    %v105 = vlaneseq
    %v106 = vshrl.u32 %v105, 7
    %v107 = vsub.s32 0, %v106
    %v108 = vrot.slane %v93, %v107
    %v109 = vlaneseq
    %v110 = vshrl.u32 %v109, 7
    %v111 = vsub.s32 0, %v110
    %v112 = vrot.slane %v95, %v111
    %v113 = vlaneseq
    %v114 = vshrl.u32 %v113, 7
    %v115 = vsub.s32 0, %v114
    %v116 = vrot.slane %v78, %v115
    %v117 = vlaneseq
    %v118 = vshrl.u32 %v117, 7
    %v119 = vsub.s32 0, %v118
    %v120 = vrot.slane %v92, %v119
    %v121 = vlaneseq
    %v122 = vshrl.u32 %v121, 7
    %v123 = vsub.s32 0, %v122
    %v124 = vrot.slane %v94, %v123
    %v125 = vlaneseq
    %v126 = vshrl.u32 %v125, 7
    %v127 = vsub.s32 0, %v126
    %v128 = vrot.slane %v96, %v127
    %v137 = vadd.f32 %v38, %v100
    %v138 = vadd.f32 %v39, %v104
    %v139 = vadd.f32 %v40, %v108
    %v140 = vadd.f32 %v41, %v112
    %v141 = vadd.f32 %v42, %v116
    %v142 = vadd.f32 %v43, %v120
    %v143 = vadd.f32 %v44, %v124
    %v144 = vadd.f32 %v45, %v128
    %vm145 = vcmask 254976
    %146 = vst.msk [vmem:[#allocation7] sm:$0x3] %vm145, %v137
    %147 = vst.msk [vmem:[#allocation7 + $0x2] sm:$0x3] %vm145, %v138
    %148 = vst.msk [vmem:[#allocation7 + $0x4] sm:$0x3] %vm145, %v139
    %149 = vst.msk [vmem:[#allocation7 + $0x6] sm:$0x3] %vm145, %v140
    %150 = vst.msk [vmem:[#allocation7 + $0x8] sm:$0x3] %vm145, %v141
    %151 = vst.msk [vmem:[#allocation7 + $0xa] sm:$0x3] %vm145, %v142
    %152 = vst.msk [vmem:[#allocation7 + $0xc] sm:$0x3] %vm145, %v143
    %153 = vst.msk [vmem:[#allocation7 + $0xe] sm:$0x3] %vm145, %v144
    // Predicated region
    $region18: #{tpu_custom_call.1} parent=1 // pred_check
      _
    $region19: #{tpu_custom_call.1} parent=1 // pred_check_branch
      %155 = sbr.rel (0) target = $region21
    $region20: #{tpu_custom_call.1} parent=1 // pred_region
      %s157 = ssub.s32 256, 256
      %158 = vsyncadd [#allocation4], %s157
      %s159 = sshll.u32 [#allocation7], 4
      %s160 = int_to_ptr.vmem [resolvable:$true] %s159
      %165 = dma.vmem_to_hbm [thread:$0]  %s160, 256, %s2, [#allocation4], 32, 32, 2
    $region21: #{tpu_custom_call.1} parent=1 // pred_fallthru
      _
    // Predicated region
    $region22: #{tpu_custom_call.1} parent=1 // pred_check
      _
    $region23: #{tpu_custom_call.1} parent=1 // pred_check_branch
      %167 = sbr.rel (0) target = $region25
    $region24: #{tpu_custom_call.1} parent=1 // pred_region
      %168 = dma.done [#allocation4], 256
    $region25: #{tpu_custom_call.1} parent=1 // pred_fallthru
      _
    %169 = vsyncpa [#allocation3], 1
    %170 = vsyncpa [#allocation6], 1
    %171 = vsyncpa [#allocation4], 1

</llo_original>
